<compile_context>
chip_gen: v6e
topology: v6e:2x2x1
jax: 0.10.0
libtpu: 0.0.40
codegen_flags: <defaults>
</compile_context>

<pallas_src>
import functools

import jax
import jax.numpy as jnp
from jax.experimental import pallas as pl
from jax.experimental.pallas import tpu as pltpu

HIDDEN = 512  # fixed by the module: nn.Linear(2, 512)


# ---------------------------------------------------------------------------
# Fused kernel: per-n-tile positional MLP (computed once, at b == 0) + add.
# ---------------------------------------------------------------------------
def _fused_kernel(x_ref, w1_ref, b1_ref, w2_ref, o_ref, pos_ref,
                  *, tn, ctxlen, half):
    # x_ref/o_ref: (1, tn, E)   w1_ref: (2, 512)   b1_ref: (1, 512)
    # w2_ref: (512, E) bf16     pos_ref (scratch): (tn, E) f32
    n = pl.program_id(0)
    b = pl.program_id(1)

    @pl.when(b == 0)
    def _():
        # Global flat row index for this n-tile, generated in-kernel.
        r = jax.lax.broadcasted_iota(jnp.int32, (tn, 1), 0).astype(jnp.float32)
        idx = r + (n * tn).astype(jnp.float32)           # (tn, 1)
        # Robust floor-division: (idx + 0.5)/ctxlen sits >= 0.5/ctxlen away from
        # integer boundaries, so f32 rounding cannot flip the floor.
        hh = jnp.floor((idx + 0.5) * (1.0 / ctxlen))      # row coordinate
        ww = idx - hh * ctxlen                            # col coordinate (exact)
        inv_half = 1.0 / half
        ch = (hh - half) * inv_half                       # (tn, 1)
        cw = (ww - half) * inv_half                       # (tn, 1)

        # VPU formulation of the K=2 matmul: coords @ w1 == ch*w1[0,:] + cw*w1[1,:]
        w1 = w1_ref[...]
        h = ch * w1[0:1, :] + cw * w1[1:2, :] + b1_ref[...]   # (tn, 512)
        h = jnp.maximum(h, 0.0)                                # ReLU
        # 512->E projection on the MXU: bf16 inputs, f32 accumulation.
        pos_ref[...] = jnp.dot(h.astype(jnp.bfloat16), w2_ref[...],
                               preferred_element_type=jnp.float32)

    # Memory-bound broadcast add (pos stays resident across the b axis).
    o_ref[...] = (x_ref[...].astype(jnp.float32)
                  + pos_ref[...][None]).astype(o_ref.dtype)


def relative_position_embed(x, w1, b1, w2):
    """x: (B, N, E); returns x + projector(coords), broadcast over batch."""
    B, N, E = x.shape
    ctxlen = int(round(N ** 0.5))
    assert ctxlen * ctxlen == N, "sequence length must be a perfect square"
    half = ctxlen // 2
    assert half > 0, "ctxlen must be >= 2 (mirrors the PyTorch module's division)"

    f32 = jnp.float32
    w1f = w1.astype(f32)                        # (2, 512)
    b1f = b1.reshape(1, HIDDEN).astype(f32)     # (1, 512)
    w2bf = w2.astype(jnp.bfloat16)              # (512, E) — MXU bf16 input

    # ---- tile sizing from the PADDED (8,128) VMEM footprint ----
    itemsize = x.dtype.itemsize
    padded_e = pl.cdiv(E, 128) * 128
    target_block_bytes = 2 * 1024 * 1024        # ~2 MiB of x per block
    rows = max(8, (target_block_bytes // (padded_e * itemsize)) // 8 * 8)
    tn = N if rows >= N else int(rows)          # multiple of 8 or full extent
    grid_n = pl.cdiv(N, tn)
    grid = (grid_n, B)                          # n outer, b inner (b fastest)

    kernel = functools.partial(_fused_kernel, tn=tn, ctxlen=ctxlen, half=half)

    bytes_accessed = (2 * B * N * E * itemsize            # read x + write out
                      + 2 * HIDDEN * 4 + HIDDEN * 4       # w1, b1
                      + HIDDEN * E * 2)                    # w2 (bf16)
    flops = B * N * E + grid_n * (2 * tn * HIDDEN * E)     # add + per-tile MLP

    out = pl.pallas_call(
        kernel,
        out_shape=jax.ShapeDtypeStruct((B, N, E), x.dtype),
        grid_spec=pltpu.PrefetchScalarGridSpec(
            num_scalar_prefetch=0,
            grid=grid,
            in_specs=[
                pl.BlockSpec((1, tn, E), lambda n, b: (b, n, 0)),   # x
                pl.BlockSpec((2, HIDDEN), lambda n, b: (0, 0)),     # w1
                pl.BlockSpec((1, HIDDEN), lambda n, b: (0, 0)),     # b1
                pl.BlockSpec((HIDDEN, E), lambda n, b: (0, 0)),     # w2 (bf16)
            ],
            out_specs=pl.BlockSpec((1, tn, E), lambda n, b: (b, n, 0)),
            scratch_shapes=[pltpu.VMEM((tn, E), jnp.float32)],       # pos tile
        ),
        compiler_params=pltpu.CompilerParams(
            dimension_semantics=("parallel", "arbitrary"),
        ),
        cost_estimate=pl.CostEstimate(
            flops=flops, transcendentals=0, bytes_accessed=bytes_accessed),
    )(x, w1f, b1f, w2bf)
    return out


def _reference(x, w1, b1, w2):
    B, N, E = x.shape
    ctxlen = int(round(N ** 0.5))
    half = ctxlen // 2
    c = jnp.arange(0, ctxlen, dtype=x.dtype)
    hh, ww = jnp.meshgrid(c, c, indexing="ij")
    table = (jnp.stack([hh, ww], axis=0) - half) / half
    coords = table.reshape(2, N).T
    h = jnp.maximum(coords @ w1 + b1, 0.0)
    pos = h @ w2
    return x + pos[None]


if __name__ == "__main__":
    # Small shapes consistent with the module: batch=2, seq=64 (ctxlen=8), embed_dim=32
    B, ctxlen, E = 2, 8, 32
    N = ctxlen * ctxlen

    key = jax.random.PRNGKey(0)
    kx, k1, kb, k2 = jax.random.split(key, 4)

    x = jax.random.normal(kx, (B, N, E), dtype=jnp.float32)
    # Shapes from nn.Linear(2,512,bias=True), nn.Linear(512,E,bias=False);
    # stored transposed for row-major matmul.
    w1 = jax.random.normal(k1, (2, HIDDEN), dtype=jnp.float32) * 0.02
    b1 = jax.random.normal(kb, (HIDDEN,), dtype=jnp.float32) * 0.02
    w2 = jax.random.normal(k2, (HIDDEN, E), dtype=jnp.float32) * 0.02

    out = jax.block_until_ready(relative_position_embed(x, w1, b1, w2))
    ref = _reference(x, w1, b1, w2)

    assert out.shape == (B, N, E)
    # Tolerance accounts for the bf16 MXU inputs (f32 accumulation).
    assert jnp.allclose(out, ref, atol=2e-3, rtol=2e-3), "mismatch vs reference"

    print("KERNEL_OK")
</pallas_src>

<mosaic_0001>
module attributes {stable_mosaic.version = 11 : i64} {
  func.func @_fused_kernel(%arg0: i32, %arg1: i32, %arg2: memref<1x64x32xf32, #tpu.memory_space<vmem>>, %arg3: memref<2x512xf32, #tpu.memory_space<vmem>>, %arg4: memref<1x512xf32, #tpu.memory_space<vmem>>, %arg5: memref<512x32xbf16, #tpu.memory_space<vmem>>, %arg6: memref<1x64x32xf32, #tpu.memory_space<vmem>>, %arg7: memref<64x32xf32, #tpu.memory_space<vmem>>) attributes {dimension_semantics = [#tpu.dimension_semantics<parallel>, #tpu.dimension_semantics<arbitrary>], iteration_bounds = array<i64: 1, 2>, scalar_prefetch = 0 : i64, scratch_operands = 1 : i64, tpu.core_type = #tpu.core_type<tc>, window_params = [{transform_indices = @transform_0, window_bounds = array<i64: 1, 64, 32>}, {pipeline_mode = #tpu.pipeline_mode<synchronous>, transform_indices = @transform_1, window_bounds = array<i64: 2, 512>}, {pipeline_mode = #tpu.pipeline_mode<synchronous>, transform_indices = @transform_2, window_bounds = array<i64: 1, 512>}, {pipeline_mode = #tpu.pipeline_mode<synchronous>, transform_indices = @transform_3, window_bounds = array<i64: 512, 32>}, {transform_indices = @transform_4, window_bounds = array<i64: 1, 64, 32>}]} {
    %c0_i32 = arith.constant 0 : i32
    %0 = arith.cmpi eq, %arg1, %c0_i32 : i32
    %1 = arith.extui %0 : i1 to i32
    %c0_i32_0 = arith.constant 0 : i32
    %2 = arith.cmpi ne, %1, %c0_i32_0 : i32
    scf.if %2 {
      %8 = tpu.iota {dimensions = array<i32: 0>} : vector<64x1xi32>
      %9 = arith.sitofp %8 : vector<64x1xi32> to vector<64x1xf32>
      %c64_i32 = arith.constant 64 : i32
      %10 = arith.muli %arg0, %c64_i32 : i32
      %11 = arith.sitofp %10 : i32 to f32
      %12 = vector.broadcast %11 : f32 to vector<64x1xf32>
      %13 = arith.addf %9, %12 : vector<64x1xf32>
      %cst = arith.constant 5.000000e-01 : f32
      %14 = vector.broadcast %cst : f32 to vector<64x1xf32>
      %15 = arith.addf %13, %14 : vector<64x1xf32>
      %cst_8 = arith.constant 1.250000e-01 : f32
      %16 = vector.broadcast %cst_8 : f32 to vector<64x1xf32>
      %17 = arith.mulf %15, %16 : vector<64x1xf32>
      %18 = math.floor %17 : vector<64x1xf32>
      %cst_9 = arith.constant 8.000000e+00 : f32
      %19 = vector.broadcast %cst_9 : f32 to vector<64x1xf32>
      %20 = arith.mulf %18, %19 : vector<64x1xf32>
      %21 = arith.subf %13, %20 : vector<64x1xf32>
      %cst_10 = arith.constant 4.000000e+00 : f32
      %22 = vector.broadcast %cst_10 : f32 to vector<64x1xf32>
      %23 = arith.subf %18, %22 : vector<64x1xf32>
      %cst_11 = arith.constant 2.500000e-01 : f32
      %24 = vector.broadcast %cst_11 : f32 to vector<64x1xf32>
      %25 = arith.mulf %23, %24 : vector<64x1xf32>
      %cst_12 = arith.constant 4.000000e+00 : f32
      %26 = vector.broadcast %cst_12 : f32 to vector<64x1xf32>
      %27 = arith.subf %21, %26 : vector<64x1xf32>
      %cst_13 = arith.constant 2.500000e-01 : f32
      %28 = vector.broadcast %cst_13 : f32 to vector<64x1xf32>
      %29 = arith.mulf %27, %28 : vector<64x1xf32>
      %c0_14 = arith.constant 0 : index
      %c0_15 = arith.constant 0 : index
      %30 = vector.load %arg3[%c0_14, %c0_15] : memref<2x512xf32, #tpu.memory_space<vmem>>, vector<2x512xf32>
      %31 = vector.extract_strided_slice %30 {offsets = [0, 0], sizes = [1, 512], strides = [1, 1]} : vector<2x512xf32> to vector<1x512xf32>
      %32 = vector.broadcast %25 : vector<64x1xf32> to vector<64x512xf32>
      %33 = vector.broadcast %31 : vector<1x512xf32> to vector<64x512xf32>
      %34 = arith.mulf %32, %33 : vector<64x512xf32>
      %35 = vector.extract_strided_slice %30 {offsets = [1, 0], sizes = [1, 512], strides = [1, 1]} : vector<2x512xf32> to vector<1x512xf32>
      %36 = vector.broadcast %29 : vector<64x1xf32> to vector<64x512xf32>
      %37 = vector.broadcast %35 : vector<1x512xf32> to vector<64x512xf32>
      %38 = arith.mulf %36, %37 : vector<64x512xf32>
      %39 = arith.addf %34, %38 : vector<64x512xf32>
      %c0_16 = arith.constant 0 : index
      %c0_17 = arith.constant 0 : index
      %40 = vector.load %arg4[%c0_16, %c0_17] : memref<1x512xf32, #tpu.memory_space<vmem>>, vector<1x512xf32>
      %41 = vector.broadcast %40 : vector<1x512xf32> to vector<64x512xf32>
      %42 = arith.addf %39, %41 : vector<64x512xf32>
      %cst_18 = arith.constant 0.000000e+00 : f32
      %43 = vector.broadcast %cst_18 : f32 to vector<64x512xf32>
      %44 = arith.maximumf %42, %43 : vector<64x512xf32>
      %45 = arith.truncf %44 : vector<64x512xf32> to vector<64x512xbf16>
      %c0_19 = arith.constant 0 : index
      %c0_20 = arith.constant 0 : index
      %46 = vector.load %arg5[%c0_19, %c0_20] : memref<512x32xbf16, #tpu.memory_space<vmem>>, vector<512x32xbf16>
      %cst_21 = arith.constant dense<0.000000e+00> : vector<64x32xf32>
      %47 = tpu.matmul %45, %46, %cst_21 {dimension_numbers = #tpu.dot_dimension_numbers<[1], [0], [0], [1], [0, 0, 1, 1], [], []>} : vector<64x512xbf16>, vector<512x32xbf16>, vector<64x32xf32> -> vector<64x32xf32>
      %c0_22 = arith.constant 0 : index
      %c0_23 = arith.constant 0 : index
      %48 = vector.load %arg7[%c0_22, %c0_23] : memref<64x32xf32, #tpu.memory_space<vmem>>, vector<64x32xf32>
      tpu.vector_store %arg7[%c0_22, %c0_23], %47 {strides = array<i32>} : memref<64x32xf32, #tpu.memory_space<vmem>>, vector<64x32xf32>,
    } else {
    }
    %c0 = arith.constant 0 : index
    %c0_1 = arith.constant 0 : index
    %c0_2 = arith.constant 0 : index
    %3 = vector.load %arg2[%c0, %c0_1, %c0_2] : memref<1x64x32xf32, #tpu.memory_space<vmem>>, vector<1x64x32xf32>
    %c0_3 = arith.constant 0 : index
    %c0_4 = arith.constant 0 : index
    %4 = vector.load %arg7[%c0_3, %c0_4] : memref<64x32xf32, #tpu.memory_space<vmem>>, vector<64x32xf32>
    %5 = vector.shape_cast %4 : vector<64x32xf32> to vector<1x64x32xf32>
    %6 = arith.addf %3, %5 : vector<1x64x32xf32>
    %c0_5 = arith.constant 0 : index
    %c0_6 = arith.constant 0 : index
    %c0_7 = arith.constant 0 : index
    %7 = vector.load %arg6[%c0_5, %c0_6, %c0_7] : memref<1x64x32xf32, #tpu.memory_space<vmem>>, vector<1x64x32xf32>
    tpu.vector_store %arg6[%c0_5, %c0_6, %c0_7], %6 {strides = array<i32>} : memref<1x64x32xf32, #tpu.memory_space<vmem>>, vector<1x64x32xf32>,
    return
  }
  func.func @transform_0(%arg0: i32, %arg1: i32) -> (i32, i32, i32) {
    %c0_i32 = arith.constant 0 : i32
    %c0_i32_0 = arith.constant 0 : i32
    return %arg1, %arg0, %c0_i32 : i32, i32, i32
  }
  func.func @transform_1(%arg0: i32, %arg1: i32) -> (i32, i32) {
    %c0_i32 = arith.constant 0 : i32
    %c0_i32_0 = arith.constant 0 : i32
    %c0_i32_1 = arith.constant 0 : i32
    return %c0_i32, %c0_i32_0 : i32, i32
  }
  func.func @transform_2(%arg0: i32, %arg1: i32) -> (i32, i32) {
    %c0_i32 = arith.constant 0 : i32
    %c0_i32_0 = arith.constant 0 : i32
    %c0_i32_1 = arith.constant 0 : i32
    return %c0_i32, %c0_i32_0 : i32, i32
  }
  func.func @transform_3(%arg0: i32, %arg1: i32) -> (i32, i32) {
    %c0_i32 = arith.constant 0 : i32
    %c0_i32_0 = arith.constant 0 : i32
    %c0_i32_1 = arith.constant 0 : i32
    return %c0_i32, %c0_i32_0 : i32, i32
  }
  func.func @transform_4(%arg0: i32, %arg1: i32) -> (i32, i32, i32) {
    %c0_i32 = arith.constant 0 : i32
    %c0_i32_0 = arith.constant 0 : i32
    return %arg1, %arg0, %c0_i32 : i32, i32, i32
  }
}

</mosaic_0001>

<llo_original>
// kernel: tpu_custom_call.1
$region0: #{tpu_custom_call.1}
  #allocation0 [shape = 'u32[]', space=smem, size = 0x4, offset = 0x4, fixed_abs, tag = 'smem constant byte address 0x4 - core index']
  #allocation1 [shape = 'u32[144,128]{1,0:T(1,128)}', space=vmem, size = 0x12000, scoped, tag = 'internal scratch']
  #allocation2 [shape = 'f32[64,32]{1,0:T(8,128)}', space=vmem, size = 0x8000, scoped, tag = 'scratch operand']
  %s0 = inlined_call_operand.vmem [shape: f32[2,64,32], index: 0, kind: input, shape index: {}]
  %s1 = inlined_call_operand.vmem [shape: f32[2,512], index: 1, kind: input, shape index: {}]
  %s2 = inlined_call_operand.vmem [shape: f32[1,512], index: 2, kind: input, shape index: {}]
  %s3 = inlined_call_operand.vmem [shape: bf16[512,32], index: 3, kind: input, shape index: {}]
  %s4 = inlined_call_operand.vmem [shape: f32[2,64,32], index: 4, kind: output, shape index: {}]
  %s5 = sld [smem:[#allocation0]]
  $region53: #{tpu_custom_call.1} parent=0
    _
  %s7 = ssub.s32 1, %s5
  %s8 = scalar_select 0, %s7, %s5
  loop: start=0, step=1, limit=4
  $region2: #{tpu_custom_call.1} parent=0 // loop_pre_header
    _
  $region3: #{tpu_custom_call.1} parent=0 // loop_header
    %s10 = sphi 0, %s14
    %p11 = scmp.ge.s32.totalorder %s10, 4
    %s17 = sphi 0, %s29
    %s18 = sphi 0, %s25
    %s19 = sphi 0, %s17
    %s20 = sphi 0, %s18
    %s21 = sphi 0, %s19
    %s22 = sphi 0, %s20
    %s34 = sphi 0, %s36
    %s37 = sphi 0, %s34
    %s38 = sphi 0, %s37
    %s54 = sphi 0, %s38
    %s58 = sphi 0, %s58
    %s60 = sphi 0, %s58
    %s61 = sphi 0, %s60
    %s75 = sphi 0, %s61
    %s79 = sphi 0, %s79
    %s81 = sphi 0, %s79
    %s82 = sphi 0, %s81
    %s96 = sphi 0, %s82
    %s100 = sphi 0, %s100
    %s102 = sphi 0, %s100
    %s103 = sphi 0, %s102
    %s117 = sphi 0, %s103
    %s125 = sphi 0, %s127
    %s128 = sphi 0, %s125
    %s129 = sphi 0, %s128
    %s145 = sphi 0, %s129
  $region4: #{tpu_custom_call.1} parent=0 // loop_header_branch
    %13 = sbr.rel (%p11) target = $region8
  $region5: #{tpu_custom_call.1} parent=0 // loop_body
    %s15 = ssub.s32 %s10, 1
    %s16 = ssub.s32 %s10, 2
    %s23 = sadd.s32 1, %s18
    %p24 = scmp.ge.s32.totalorder %s23, 2
    %s25 = scalar_select %p24, 0, %s23
    %s26 = sadd.s32 1, %s17
    %s27 = scalar_select %p24, %s26, %s17
    %p28 = scmp.ge.s32.totalorder %s27, 1
    %s29 = scalar_select %p28, 0, %s27
    %s30 = ssub.s32 %s18, %s25
    %s31 = ssub.s32 %s17, %s29
    %s32 = sor.u32 %s30, %s31
    %p33 = scmp.eq.s32.totalorder %s32, 0
    %s35 = sadd.s32 %s34, 1
    %s36 = scalar_select %p33, %s34, %s35
    %p39 = pneg %p33
    %p40 = scmp.eq.s32.totalorder %s10, 1
    %p41 = por %p39, %p40
    %p42 = scmp.ne.s32.totalorder %s34, %s37
    %p43 = scmp.eq.s32.totalorder %s10, 0
    %p44 = por %p42, %p43
    %p45 = scmp.ne.s32.totalorder %s34, %s37
    %p46 = scmp.eq.s32.totalorder %s15, 1
    %p47 = por %p45, %p46
    %p48 = scmp.ne.s32.totalorder %s37, %s38
    %p49 = scmp.eq.s32.totalorder %s15, 0
    %p50 = por %p48, %p49
    %p51 = scmp.ne.s32.totalorder %s37, %s38
    %p52 = scmp.eq.s32.totalorder %s16, 1
    %p53 = por %p51, %p52
    %p55 = scmp.ne.s32.totalorder %s38, %s54
    %p56 = scmp.eq.s32.totalorder %s16, 0
    %p57 = por %p55, %p56
    %s59 = sadd.s32 %s58, 1
    %p62 = scmp.eq.s32.totalorder %s10, 1
    %p63 = scmp.ne.s32.totalorder %s58, %s60
    %p64 = scmp.eq.s32.totalorder %s10, 0
    %p65 = por %p63, %p64
    %p66 = scmp.ne.s32.totalorder %s58, %s60
    %p67 = scmp.eq.s32.totalorder %s15, 1
    %p68 = por %p66, %p67
    %p69 = scmp.ne.s32.totalorder %s60, %s61
    %p70 = scmp.eq.s32.totalorder %s15, 0
    %p71 = por %p69, %p70
    %p72 = scmp.ne.s32.totalorder %s60, %s61
    %p73 = scmp.eq.s32.totalorder %s16, 1
    %p74 = por %p72, %p73
    %p76 = scmp.ne.s32.totalorder %s61, %s75
    %p77 = scmp.eq.s32.totalorder %s16, 0
    %p78 = por %p76, %p77
    %s80 = sadd.s32 %s79, 1
    %p83 = scmp.eq.s32.totalorder %s10, 1
    %p84 = scmp.ne.s32.totalorder %s79, %s81
    %p85 = scmp.eq.s32.totalorder %s10, 0
    %p86 = por %p84, %p85
    %p87 = scmp.ne.s32.totalorder %s79, %s81
    %p88 = scmp.eq.s32.totalorder %s15, 1
    %p89 = por %p87, %p88
    %p90 = scmp.ne.s32.totalorder %s81, %s82
    %p91 = scmp.eq.s32.totalorder %s15, 0
    %p92 = por %p90, %p91
    %p93 = scmp.ne.s32.totalorder %s81, %s82
    %p94 = scmp.eq.s32.totalorder %s16, 1
    %p95 = por %p93, %p94
    %p97 = scmp.ne.s32.totalorder %s82, %s96
    %p98 = scmp.eq.s32.totalorder %s16, 0
    %p99 = por %p97, %p98
    %s101 = sadd.s32 %s100, 1
    %p104 = scmp.eq.s32.totalorder %s10, 1
    %p105 = scmp.ne.s32.totalorder %s100, %s102
    %p106 = scmp.eq.s32.totalorder %s10, 0
    %p107 = por %p105, %p106
    %p108 = scmp.ne.s32.totalorder %s100, %s102
    %p109 = scmp.eq.s32.totalorder %s15, 1
    %p110 = por %p108, %p109
    %p111 = scmp.ne.s32.totalorder %s102, %s103
    %p112 = scmp.eq.s32.totalorder %s15, 0
    %p113 = por %p111, %p112
    %p114 = scmp.ne.s32.totalorder %s102, %s103
    %p115 = scmp.eq.s32.totalorder %s16, 1
    %p116 = por %p114, %p115
    %p118 = scmp.ne.s32.totalorder %s103, %s117
    %p119 = scmp.eq.s32.totalorder %s16, 0
    %p120 = por %p118, %p119
    %s121 = ssub.s32 %s18, %s25
    %s122 = ssub.s32 %s17, %s29
    %s123 = sor.u32 %s121, %s122
    %p124 = scmp.eq.s32.totalorder %s123, 0
    %s126 = sadd.s32 %s125, 1
    %s127 = scalar_select %p124, %s125, %s126
    %p130 = pneg %p124
    %p131 = scmp.eq.s32.totalorder %s10, 1
    %p132 = por %p130, %p131
    %p133 = scmp.ne.s32.totalorder %s125, %s128
    %p134 = scmp.eq.s32.totalorder %s10, 0
    %p135 = por %p133, %p134
    %p136 = scmp.ne.s32.totalorder %s125, %s128
    %p137 = scmp.eq.s32.totalorder %s15, 1
    %p138 = por %p136, %p137
    %p139 = scmp.ne.s32.totalorder %s128, %s129
    %p140 = scmp.eq.s32.totalorder %s15, 0
    %p141 = por %p139, %p140
    %p142 = scmp.ne.s32.totalorder %s128, %s129
    %p143 = scmp.eq.s32.totalorder %s16, 1
    %p144 = por %p142, %p143
    %p146 = scmp.ne.s32.totalorder %s129, %s145
    %p147 = scmp.eq.s32.totalorder %s16, 0
    %p148 = por %p146, %p147
    %p149 = scmp.le.s32.totalorder 1, %s10
    %p150 = scmp.lt.s32.totalorder %s10, 3
    %p151 = pnand %p149, %p150
    %p152 = pneg %p151
    // Predicated region
    $region9: #{tpu_custom_call.1} parent=5 // pred_check
      _
    $region10: #{tpu_custom_call.1} parent=5 // pred_check_branch
      %154 = sbr.rel (%p151) target = $region12
    $region11: #{tpu_custom_call.1} parent=5 // pred_region
      %s155 = ssub.s32 %s10, 1
      // Predicated region
      $region13: #{tpu_custom_call.1} parent=11 // pred_check
        %p156 = pneg %p71
      $region14: #{tpu_custom_call.1} parent=11 // pred_check_branch
        %158 = sbr.rel (%p156) target = $region16
      $region15: #{tpu_custom_call.1} parent=11 // pred_region
        _
      $region16: #{tpu_custom_call.1} parent=11 // pred_fallthru
        _
      // Predicated region
      $region17: #{tpu_custom_call.1} parent=11 // pred_check
        %p159 = pneg %p92
      $region18: #{tpu_custom_call.1} parent=11 // pred_check_branch
        %161 = sbr.rel (%p159) target = $region20
      $region19: #{tpu_custom_call.1} parent=11 // pred_region
        _
      $region20: #{tpu_custom_call.1} parent=11 // pred_fallthru
        _
      // Predicated region
      $region21: #{tpu_custom_call.1} parent=11 // pred_check
        %p162 = pneg %p113
      $region22: #{tpu_custom_call.1} parent=11 // pred_check_branch
        %164 = sbr.rel (%p162) target = $region24
      $region23: #{tpu_custom_call.1} parent=11 // pred_region
        _
      $region24: #{tpu_custom_call.1} parent=11 // pred_fallthru
        _
    $region12: #{tpu_custom_call.1} parent=5 // pred_fallthru
      _
    %p165 = scmp.lt.s32.totalorder %s10, 2
    // Predicated region
    $region25: #{tpu_custom_call.1} parent=5 // pred_check
      %p166 = pneg %p165
    $region26: #{tpu_custom_call.1} parent=5 // pred_check_branch
      %168 = sbr.rel (%p166) target = $region28
    $region27: #{tpu_custom_call.1} parent=5 // pred_region
      // Predicated region
      $region29: #{tpu_custom_call.1} parent=27 // pred_check
        %p169 = pneg %p44
      $region30: #{tpu_custom_call.1} parent=27 // pred_check_branch
        %171 = sbr.rel (%p169) target = $region32
      $region31: #{tpu_custom_call.1} parent=27 // pred_region
        %s172 = smul.u32 8, %s17
        %p173 = scmp.lt.s32.totalorder %s18, 1
        %s174 = scalar_select %p173, %s18, 1
        %p175 = scmp.lt.s32.totalorder %s172, 7
        %s176 = scalar_select %p175, %s172, 7
        %s177 = smul.addr %s174, 8
        %s178 = sadd.s32 %s176, %s177
        %s179 = smul.addr %s178, 8
        %s180 = scalar_lea.vmem %s0, %s179
        %s181 = smul.u32 8, %s17
      $region32: #{tpu_custom_call.1} parent=27 // pred_fallthru
        _
    $region28: #{tpu_custom_call.1} parent=5 // pred_fallthru
      _
    %p182 = scmp.le.s32.totalorder 1, %s10
    %p183 = scmp.lt.s32.totalorder %s10, 3
    %p184 = pnand %p182, %p183
    %p185 = pneg %p184
    // Predicated region
    $region33: #{tpu_custom_call.1} parent=5 // pred_check
      _
    $region34: #{tpu_custom_call.1} parent=5 // pred_check_branch
      %187 = sbr.rel (%p184) target = $region36
    $region35: #{tpu_custom_call.1} parent=5 // pred_region
      %s188 = ssub.s32 %s10, 1
      %s189 = smul.u32 8, %s19
      %p190 = scmp.lt.s32.totalorder %s20, 1
      %s191 = scalar_select %p190, %s20, 1
      %p192 = scmp.lt.s32.totalorder %s189, 7
      %s193 = scalar_select %p192, %s189, 7
      %s194 = smul.addr %s191, 8
      %s195 = sadd.s32 %s193, %s194
      %s196 = smul.addr %s195, 8
      %s197 = scalar_lea.vmem %s0, %s196
      %p198 = pneg %p50
      %p199 = pneg %p47
      %p200 = pneg %p71
      %p201 = pneg %p68
      %p202 = pneg %p92
      %p203 = pneg %p89
      %p204 = pneg %p113
      %p205 = pneg %p110
      %p206 = pneg %p141
      %p207 = pneg %p138
      %s208 = smul.u32 8, %s19
      %p209 = scmp.lt.s32.totalorder %s20, 1
      %s210 = scalar_select %p209, %s20, 1
      %p211 = scmp.lt.s32.totalorder %s208, 7
      %s212 = scalar_select %p211, %s208, 7
      %s213 = smul.addr %s210, 8
      %s214 = sadd.s32 %s212, %s213
      %s215 = smul.addr %s214, 8
      %s216 = scalar_lea.vmem %s4, %s215
      %s217 = smul.u32 8, %s19
      %p218 = scmp.lt.s32.totalorder %s20, 1
      %s219 = scalar_select %p218, %s20, 1
      %p220 = scmp.lt.s32.totalorder %s217, 7
      %s221 = scalar_select %p220, %s217, 7
      %s222 = smul.addr %s219, 8
      %s223 = sadd.s32 %s221, %s222
      %s224 = smul.addr %s223, 8
      %s225 = scalar_lea.vmem %s0, %s224
      %s226 = smul.u32 8, %s19
      %s227 = smul.u32 8, %s19
      %p228 = scmp.lt.s32.totalorder %s20, 1
      %s229 = scalar_select %p228, %s20, 1
      %p230 = scmp.lt.s32.totalorder %s227, 7
      %s231 = scalar_select %p230, %s227, 7
      %s232 = smul.addr %s229, 8
      %s233 = sadd.s32 %s231, %s232
      %s234 = smul.addr %s233, 8
      %s235 = scalar_lea.vmem %s4, %s234
      %s236 = smul.u32 8, %s19
      %p238 = scmp.eq.s32.totalorder %s20, 0
      // Predicated region
      $region37: #{tpu_custom_call.1} parent=35 // pred_check
        %p239 = pneg %p238
      $region38: #{tpu_custom_call.1} parent=35 // pred_check_branch
        %241 = sbr.rel (%p239) target = $region40
      $region39: #{tpu_custom_call.1} parent=35 // pred_region
        %v242 = vlaneseq
        %v243 = vshrl.u32 %v242, 7
        %v244 = vadd.s32 %v243, 8
        %v245 = vadd.s32 %v243, 16
        %v246 = vadd.s32 %v243, 24
        %v247 = vadd.s32 %v243, 32
        %v248 = vadd.s32 %v243, 40
        %v249 = vadd.s32 %v243, 48
        %v250 = vadd.s32 %v243, 56
        %v251 = vcvt.s32.f32 %v243
        %v252 = vcvt.s32.f32 %v244
        %v253 = vcvt.s32.f32 %v245
        %v254 = vcvt.s32.f32 %v246
        %v255 = vcvt.s32.f32 %v247
        %v256 = vcvt.s32.f32 %v248
        %v257 = vcvt.s32.f32 %v249
        %v258 = vcvt.s32.f32 %v250
        %s259 = smul.u32 %s19, 64
        %s260 = scvt.s32.f32 %s259
        %v261 = vstv %s260
        %v262 = vadd.f32 %v251, %v261
        %v263 = vadd.f32 %v252, %v261
        %v264 = vadd.f32 %v253, %v261
        %v265 = vadd.f32 %v254, %v261
        %v266 = vadd.f32 %v255, %v261
        %v267 = vadd.f32 %v256, %v261
        %v268 = vadd.f32 %v257, %v261
        %v269 = vadd.f32 %v258, %v261
        %v270 = vadd.f32 %v262, 0.5
        %v271 = vadd.f32 %v263, 0.5
        %v272 = vadd.f32 %v264, 0.5
        %v273 = vadd.f32 %v265, 0.5
        %v274 = vadd.f32 %v266, 0.5
        %v275 = vadd.f32 %v267, 0.5
        %v276 = vadd.f32 %v268, 0.5
        %v277 = vadd.f32 %v269, 0.5
        %v278 = vmul.f32 %v270, 0.125
        %v279 = vmul.f32 %v271, 0.125
        %v280 = vmul.f32 %v272, 0.125
        %v281 = vmul.f32 %v273, 0.125
        %v282 = vmul.f32 %v274, 0.125
        %v283 = vmul.f32 %v275, 0.125
        %v284 = vmul.f32 %v276, 0.125
        %v285 = vmul.f32 %v277, 0.125
        %v286 = vfloor.f32 %v278
        %v287 = vfloor.f32 %v279
        %v288 = vfloor.f32 %v280
        %v289 = vfloor.f32 %v281
        %v290 = vfloor.f32 %v282
        %v291 = vfloor.f32 %v283
        %v292 = vfloor.f32 %v284
        %v293 = vfloor.f32 %v285
        %v294 = vmul.f32 %v286, 8.0
        %v295 = vmul.f32 %v287, 8.0
        %v296 = vmul.f32 %v288, 8.0
        %v297 = vmul.f32 %v289, 8.0
        %v298 = vmul.f32 %v290, 8.0
        %v299 = vmul.f32 %v291, 8.0
        %v300 = vmul.f32 %v292, 8.0
        %v301 = vmul.f32 %v293, 8.0
        %v302 = vsub.f32 %v262, %v294
        %v303 = vsub.f32 %v263, %v295
        %v304 = vsub.f32 %v264, %v296
        %v305 = vsub.f32 %v265, %v297
        %v306 = vsub.f32 %v266, %v298
        %v307 = vsub.f32 %v267, %v299
        %v308 = vsub.f32 %v268, %v300
        %v309 = vsub.f32 %v269, %v301
        %v310 = vsub.f32 %v286, 4.0
        %v311 = vsub.f32 %v287, 4.0
        %v312 = vsub.f32 %v288, 4.0
        %v313 = vsub.f32 %v289, 4.0
        %v314 = vsub.f32 %v290, 4.0
        %v315 = vsub.f32 %v291, 4.0
        %v316 = vsub.f32 %v292, 4.0
        %v317 = vsub.f32 %v293, 4.0
        %v318 = vmul.f32 %v310, 0.25
        %v319 = vmul.f32 %v311, 0.25
        %v320 = vmul.f32 %v312, 0.25
        %v321 = vmul.f32 %v313, 0.25
        %v322 = vmul.f32 %v314, 0.25
        %v323 = vmul.f32 %v315, 0.25
        %v324 = vmul.f32 %v316, 0.25
        %v325 = vmul.f32 %v317, 0.25
        %v326 = vsub.f32 %v302, 4.0
        %v327 = vsub.f32 %v303, 4.0
        %v328 = vsub.f32 %v304, 4.0
        %v329 = vsub.f32 %v305, 4.0
        %v330 = vsub.f32 %v306, 4.0
        %v331 = vsub.f32 %v307, 4.0
        %v332 = vsub.f32 %v308, 4.0
        %v333 = vsub.f32 %v309, 4.0
        %v334 = vmul.f32 %v326, 0.25
        %v335 = vmul.f32 %v327, 0.25
        %v336 = vmul.f32 %v328, 0.25
        %v337 = vmul.f32 %v329, 0.25
        %v338 = vmul.f32 %v330, 0.25
        %v339 = vmul.f32 %v331, 0.25
        %v340 = vmul.f32 %v332, 0.25
        %v341 = vmul.f32 %v333, 0.25
        %v342 = vld [vmem:[%s1] sm:$0xff]
        %v344 = vlaneseq
        %v345 = vshrl.u32 %v344, 7
        %v346 = vsub.s32 0, %v345
        %v347 = vrot.slane %v342, %v346
        %v348 = vlaneseq
        %v349 = vshrl.u32 %v348, 7
        %v350 = vsub.s32 2, %v349
        %v351 = vrot.slane %v342, %v350
        %v352 = vlaneseq
        %v353 = vshrl.u32 %v352, 7
        %v354 = vsub.s32 4, %v353
        %v355 = vrot.slane %v342, %v354
        %v356 = vlaneseq
        %v357 = vshrl.u32 %v356, 7
        %v358 = vsub.s32 6, %v357
        %v359 = vrot.slane %v342, %v358
        %v364 = vlaneseq
        %v365 = vshrl.u32 %v364, 7
        %v366 = vsub.s32 0, %v365
        %v367 = vrot.slane %v347, %v366
        %v368 = vlaneseq
        %v369 = vshrl.u32 %v368, 7
        %v370 = vsub.s32 0, %v369
        %v371 = vrot.slane %v351, %v370
        %v372 = vlaneseq
        %v373 = vshrl.u32 %v372, 7
        %v374 = vsub.s32 0, %v373
        %v375 = vrot.slane %v355, %v374
        %v376 = vlaneseq
        %v377 = vshrl.u32 %v376, 7
        %v378 = vsub.s32 0, %v377
        %v379 = vrot.slane %v359, %v378
        %v380 = vmul.f32 %v318, %v367
        %v381 = vmul.f32 %v318, %v371
        %v382 = vmul.f32 %v318, %v375
        %v383 = vmul.f32 %v318, %v379
        %v384 = vmul.f32 %v319, %v367
        %v385 = vmul.f32 %v319, %v371
        %v386 = vmul.f32 %v319, %v375
        %v387 = vmul.f32 %v319, %v379
        %v388 = vmul.f32 %v320, %v367
        %v389 = vmul.f32 %v320, %v371
        %v390 = vmul.f32 %v320, %v375
        %v391 = vmul.f32 %v320, %v379
        %v392 = vmul.f32 %v321, %v367
        %v393 = vmul.f32 %v321, %v371
        %v394 = vmul.f32 %v321, %v375
        %v395 = vmul.f32 %v321, %v379
        %v396 = vmul.f32 %v322, %v367
        %v397 = vmul.f32 %v322, %v371
        %v398 = vmul.f32 %v322, %v375
        %v399 = vmul.f32 %v322, %v379
        %v400 = vmul.f32 %v323, %v367
        %v401 = vmul.f32 %v323, %v371
        %v402 = vmul.f32 %v323, %v375
        %v403 = vmul.f32 %v323, %v379
        %v404 = vmul.f32 %v324, %v367
        %v405 = vmul.f32 %v324, %v371
        %v406 = vmul.f32 %v324, %v375
        %v407 = vmul.f32 %v324, %v379
        %v408 = vmul.f32 %v325, %v367
        %v409 = vmul.f32 %v325, %v371
        %v410 = vmul.f32 %v325, %v375
        %v411 = vmul.f32 %v325, %v379
        %v412 = vlaneseq
        %v413 = vshrl.u32 %v412, 7
        %v414 = vsub.s32 1, %v413
        %v415 = vrot.slane %v342, %v414
        %v416 = vlaneseq
        %v417 = vshrl.u32 %v416, 7
        %v418 = vsub.s32 3, %v417
        %v419 = vrot.slane %v342, %v418
        %v420 = vlaneseq
        %v421 = vshrl.u32 %v420, 7
        %v422 = vsub.s32 5, %v421
        %v423 = vrot.slane %v342, %v422
        %v424 = vlaneseq
        %v425 = vshrl.u32 %v424, 7
        %v426 = vsub.s32 7, %v425
        %v427 = vrot.slane %v342, %v426
        %v432 = vlaneseq
        %v433 = vshrl.u32 %v432, 7
        %v434 = vsub.s32 1, %v433
        %v435 = vrot.slane %v415, %v434
        %v436 = vlaneseq
        %v437 = vshrl.u32 %v436, 7
        %v438 = vsub.s32 1, %v437
        %v439 = vrot.slane %v419, %v438
        %v440 = vlaneseq
        %v441 = vshrl.u32 %v440, 7
        %v442 = vsub.s32 1, %v441
        %v443 = vrot.slane %v423, %v442
        %v444 = vlaneseq
        %v445 = vshrl.u32 %v444, 7
        %v446 = vsub.s32 1, %v445
        %v447 = vrot.slane %v427, %v446
        %v448 = vmul.f32 %v334, %v435
        %v449 = vmul.f32 %v334, %v439
        %v450 = vmul.f32 %v334, %v443
        %v451 = vmul.f32 %v334, %v447
        %v452 = vmul.f32 %v335, %v435
        %v453 = vmul.f32 %v335, %v439
        %v454 = vmul.f32 %v335, %v443
        %v455 = vmul.f32 %v335, %v447
        %v456 = vmul.f32 %v336, %v435
        %v457 = vmul.f32 %v336, %v439
        %v458 = vmul.f32 %v336, %v443
        %v459 = vmul.f32 %v336, %v447
        %v460 = vmul.f32 %v337, %v435
        %v461 = vmul.f32 %v337, %v439
        %v462 = vmul.f32 %v337, %v443
        %v463 = vmul.f32 %v337, %v447
        %v464 = vmul.f32 %v338, %v435
        %v465 = vmul.f32 %v338, %v439
        %v466 = vmul.f32 %v338, %v443
        %v467 = vmul.f32 %v338, %v447
        %v468 = vmul.f32 %v339, %v435
        %v469 = vmul.f32 %v339, %v439
        %v470 = vmul.f32 %v339, %v443
        %v471 = vmul.f32 %v339, %v447
        %v472 = vmul.f32 %v340, %v435
        %v473 = vmul.f32 %v340, %v439
        %v474 = vmul.f32 %v340, %v443
        %v475 = vmul.f32 %v340, %v447
        %v476 = vmul.f32 %v341, %v435
        %v477 = vmul.f32 %v341, %v439
        %v478 = vmul.f32 %v341, %v443
        %v479 = vmul.f32 %v341, %v447
        %v480 = vadd.f32 %v380, %v448
        %v481 = vadd.f32 %v381, %v449
        %v482 = vadd.f32 %v382, %v450
        %v483 = vadd.f32 %v383, %v451
        %v484 = vadd.f32 %v384, %v452
        %v485 = vadd.f32 %v385, %v453
        %v486 = vadd.f32 %v386, %v454
        %v487 = vadd.f32 %v387, %v455
        %v488 = vadd.f32 %v388, %v456
        %v489 = vadd.f32 %v389, %v457
        %v490 = vadd.f32 %v390, %v458
        %v491 = vadd.f32 %v391, %v459
        %v492 = vadd.f32 %v392, %v460
        %v493 = vadd.f32 %v393, %v461
        %v494 = vadd.f32 %v394, %v462
        %v495 = vadd.f32 %v395, %v463
        %v496 = vadd.f32 %v396, %v464
        %v497 = vadd.f32 %v397, %v465
        %v498 = vadd.f32 %v398, %v466
        %v499 = vadd.f32 %v399, %v467
        %v500 = vadd.f32 %v400, %v468
        %v501 = vadd.f32 %v401, %v469
        %v502 = vadd.f32 %v402, %v470
        %v503 = vadd.f32 %v403, %v471
        %v504 = vadd.f32 %v404, %v472
        %v505 = vadd.f32 %v405, %v473
        %v506 = vadd.f32 %v406, %v474
        %v507 = vadd.f32 %v407, %v475
        %v508 = vadd.f32 %v408, %v476
        %v509 = vadd.f32 %v409, %v477
        %v510 = vadd.f32 %v410, %v478
        %v511 = vadd.f32 %v411, %v479
        %v512 = vld [vmem:[%s2] sm:$0xf]
        %v514 = vlaneseq
        %v515 = vshrl.u32 %v514, 7
        %v516 = vsub.s32 0, %v515
        %v517 = vrot.slane %v512, %v516
        %v518 = vlaneseq
        %v519 = vshrl.u32 %v518, 7
        %v520 = vsub.s32 1, %v519
        %v521 = vrot.slane %v512, %v520
        %v522 = vlaneseq
        %v523 = vshrl.u32 %v522, 7
        %v524 = vsub.s32 2, %v523
        %v525 = vrot.slane %v512, %v524
        %v526 = vlaneseq
        %v527 = vshrl.u32 %v526, 7
        %v528 = vsub.s32 3, %v527
        %v529 = vrot.slane %v512, %v528
        %v534 = vadd.f32 %v480, %v517
        %v535 = vadd.f32 %v481, %v521
        %v536 = vadd.f32 %v482, %v525
        %v537 = vadd.f32 %v483, %v529
        %v538 = vadd.f32 %v484, %v517
        %v539 = vadd.f32 %v485, %v521
        %v540 = vadd.f32 %v486, %v525
        %v541 = vadd.f32 %v487, %v529
        %v542 = vadd.f32 %v488, %v517
        %v543 = vadd.f32 %v489, %v521
        %v544 = vadd.f32 %v490, %v525
        %v545 = vadd.f32 %v491, %v529
        %v546 = vadd.f32 %v492, %v517
        %v547 = vadd.f32 %v493, %v521
        %v548 = vadd.f32 %v494, %v525
        %v549 = vadd.f32 %v495, %v529
        %v550 = vadd.f32 %v496, %v517
        %v551 = vadd.f32 %v497, %v521
        %v552 = vadd.f32 %v498, %v525
        %v553 = vadd.f32 %v499, %v529
        %v554 = vadd.f32 %v500, %v517
        %v555 = vadd.f32 %v501, %v521
        %v556 = vadd.f32 %v502, %v525
        %v557 = vadd.f32 %v503, %v529
        %v558 = vadd.f32 %v504, %v517
        %v559 = vadd.f32 %v505, %v521
        %v560 = vadd.f32 %v506, %v525
        %v561 = vadd.f32 %v507, %v529
        %v562 = vadd.f32 %v508, %v517
        %v563 = vadd.f32 %v509, %v521
        %v564 = vadd.f32 %v510, %v525
        %v565 = vadd.f32 %v511, %v529
        %v566 = vmax.f32 %v534, 0.0
        %v567 = vmax.f32 %v535, 0.0
        %v568 = vmax.f32 %v536, 0.0
        %v569 = vmax.f32 %v537, 0.0
        %v570 = vmax.f32 %v538, 0.0
        %v571 = vmax.f32 %v539, 0.0
        %v572 = vmax.f32 %v540, 0.0
        %v573 = vmax.f32 %v541, 0.0
        %v574 = vmax.f32 %v542, 0.0
        %v575 = vmax.f32 %v543, 0.0
        %v576 = vmax.f32 %v544, 0.0
        %v577 = vmax.f32 %v545, 0.0
        %v578 = vmax.f32 %v546, 0.0
        %v579 = vmax.f32 %v547, 0.0
        %v580 = vmax.f32 %v548, 0.0
        %v581 = vmax.f32 %v549, 0.0
        %v582 = vmax.f32 %v550, 0.0
        %v583 = vmax.f32 %v551, 0.0
        %v584 = vmax.f32 %v552, 0.0
        %v585 = vmax.f32 %v553, 0.0
        %v586 = vmax.f32 %v554, 0.0
        %v587 = vmax.f32 %v555, 0.0
        %v588 = vmax.f32 %v556, 0.0
        %v589 = vmax.f32 %v557, 0.0
        %v590 = vmax.f32 %v558, 0.0
        %v591 = vmax.f32 %v559, 0.0
        %v592 = vmax.f32 %v560, 0.0
        %v593 = vmax.f32 %v561, 0.0
        %v594 = vmax.f32 %v562, 0.0
        %v595 = vmax.f32 %v563, 0.0
        %v596 = vmax.f32 %v564, 0.0
        %v597 = vmax.f32 %v565, 0.0
        %v598 = vpack.c.bf16 %v570, %v566
        %v599 = vpack.c.bf16 %v571, %v567
        %v600 = vpack.c.bf16 %v572, %v568
        %v601 = vpack.c.bf16 %v573, %v569
        %v602 = vpack.c.bf16 %v578, %v574
        %v603 = vpack.c.bf16 %v579, %v575
        %v604 = vpack.c.bf16 %v580, %v576
        %v605 = vpack.c.bf16 %v581, %v577
        %v606 = vpack.c.bf16 %v586, %v582
        %v607 = vpack.c.bf16 %v587, %v583
        %v608 = vpack.c.bf16 %v588, %v584
        %v609 = vpack.c.bf16 %v589, %v585
        %v610 = vpack.c.bf16 %v594, %v590
        %v611 = vpack.c.bf16 %v595, %v591
        %v612 = vpack.c.bf16 %v596, %v592
        %v613 = vpack.c.bf16 %v597, %v593
        %v614 = vld [vmem:[%s3] sm:$0xf]
        %v615 = vld [vmem:[%s3 + $0x4] sm:$0xf]
        %v616 = vld [vmem:[%s3 + $0x8] sm:$0xf]
        %v617 = vld [vmem:[%s3 + $0xc] sm:$0xf]
        %v618 = vld [vmem:[%s3 + $0x10] sm:$0xf]
        %v619 = vld [vmem:[%s3 + $0x14] sm:$0xf]
        %v620 = vld [vmem:[%s3 + $0x18] sm:$0xf]
        %v621 = vld [vmem:[%s3 + $0x1c] sm:$0xf]
        %v622 = vld [vmem:[%s3 + $0x20] sm:$0xf]
        %v623 = vld [vmem:[%s3 + $0x24] sm:$0xf]
        %v624 = vld [vmem:[%s3 + $0x28] sm:$0xf]
        %v625 = vld [vmem:[%s3 + $0x2c] sm:$0xf]
        %v626 = vld [vmem:[%s3 + $0x30] sm:$0xf]
        %v627 = vld [vmem:[%s3 + $0x34] sm:$0xf]
        %v628 = vld [vmem:[%s3 + $0x38] sm:$0xf]
        %v629 = vld [vmem:[%s3 + $0x3c] sm:$0xf]
        %v630 = vld [vmem:[%s3 + $0x40] sm:$0xf]
        %v631 = vld [vmem:[%s3 + $0x44] sm:$0xf]
        %v632 = vld [vmem:[%s3 + $0x48] sm:$0xf]
        %v633 = vld [vmem:[%s3 + $0x4c] sm:$0xf]
        %v634 = vld [vmem:[%s3 + $0x50] sm:$0xf]
        %v635 = vld [vmem:[%s3 + $0x54] sm:$0xf]
        %v636 = vld [vmem:[%s3 + $0x58] sm:$0xf]
        %v637 = vld [vmem:[%s3 + $0x5c] sm:$0xf]
        %v638 = vld [vmem:[%s3 + $0x60] sm:$0xf]
        %v639 = vld [vmem:[%s3 + $0x64] sm:$0xf]
        %v640 = vld [vmem:[%s3 + $0x68] sm:$0xf]
        %v641 = vld [vmem:[%s3 + $0x6c] sm:$0xf]
        %v642 = vld [vmem:[%s3 + $0x70] sm:$0xf]
        %v643 = vld [vmem:[%s3 + $0x74] sm:$0xf]
        %v644 = vld [vmem:[%s3 + $0x78] sm:$0xf]
        %v645 = vld [vmem:[%s3 + $0x7c] sm:$0xf]
        %v646 = vld [vmem:[%s3 + $0x80] sm:$0xf]
        %v647 = vld [vmem:[%s3 + $0x84] sm:$0xf]
        %v648 = vld [vmem:[%s3 + $0x88] sm:$0xf]
        %v649 = vld [vmem:[%s3 + $0x8c] sm:$0xf]
        %v650 = vld [vmem:[%s3 + $0x90] sm:$0xf]
        %v651 = vld [vmem:[%s3 + $0x94] sm:$0xf]
        %v652 = vld [vmem:[%s3 + $0x98] sm:$0xf]
        %v653 = vld [vmem:[%s3 + $0x9c] sm:$0xf]
        %v654 = vld [vmem:[%s3 + $0xa0] sm:$0xf]
        %v655 = vld [vmem:[%s3 + $0xa4] sm:$0xf]
        %v656 = vld [vmem:[%s3 + $0xa8] sm:$0xf]
        %v657 = vld [vmem:[%s3 + $0xac] sm:$0xf]
        %v658 = vld [vmem:[%s3 + $0xb0] sm:$0xf]
        %v659 = vld [vmem:[%s3 + $0xb4] sm:$0xf]
        %v660 = vld [vmem:[%s3 + $0xb8] sm:$0xf]
        %v661 = vld [vmem:[%s3 + $0xbc] sm:$0xf]
        %v662 = vld [vmem:[%s3 + $0xc0] sm:$0xf]
        %v663 = vld [vmem:[%s3 + $0xc4] sm:$0xf]
        %v664 = vld [vmem:[%s3 + $0xc8] sm:$0xf]
        %v665 = vld [vmem:[%s3 + $0xcc] sm:$0xf]
        %v666 = vld [vmem:[%s3 + $0xd0] sm:$0xf]
        %v667 = vld [vmem:[%s3 + $0xd4] sm:$0xf]
        %v668 = vld [vmem:[%s3 + $0xd8] sm:$0xf]
        %v669 = vld [vmem:[%s3 + $0xdc] sm:$0xf]
        %v670 = vld [vmem:[%s3 + $0xe0] sm:$0xf]
        %v671 = vld [vmem:[%s3 + $0xe4] sm:$0xf]
        %v672 = vld [vmem:[%s3 + $0xe8] sm:$0xf]
        %v673 = vld [vmem:[%s3 + $0xec] sm:$0xf]
        %v674 = vld [vmem:[%s3 + $0xf0] sm:$0xf]
        %v675 = vld [vmem:[%s3 + $0xf4] sm:$0xf]
        %v676 = vld [vmem:[%s3 + $0xf8] sm:$0xf]
        %v677 = vld [vmem:[%s3 + $0xfc] sm:$0xf]
        %v742 = vunpack.c.l.b16 %v614
        %v743 = vunpack.c.l.b16 %v615
        %v744 = vunpack.c.l.b16 %v616
        %v745 = vunpack.c.l.b16 %v617
        %v746 = vunpack.c.l.b16 %v618
        %v747 = vunpack.c.l.b16 %v619
        %v748 = vunpack.c.l.b16 %v620
        %v749 = vunpack.c.l.b16 %v621
        %v750 = vunpack.c.l.b16 %v622
        %v751 = vunpack.c.l.b16 %v623
        %v752 = vunpack.c.l.b16 %v624
        %v753 = vunpack.c.l.b16 %v625
        %v754 = vunpack.c.l.b16 %v626
        %v755 = vunpack.c.l.b16 %v627
        %v756 = vunpack.c.l.b16 %v628
        %v757 = vunpack.c.l.b16 %v629
        %v758 = vunpack.c.l.b16 %v630
        %v759 = vunpack.c.l.b16 %v631
        %v760 = vunpack.c.l.b16 %v632
        %v761 = vunpack.c.l.b16 %v633
        %v762 = vunpack.c.l.b16 %v634
        %v763 = vunpack.c.l.b16 %v635
        %v764 = vunpack.c.l.b16 %v636
        %v765 = vunpack.c.l.b16 %v637
        %v766 = vunpack.c.l.b16 %v638
        %v767 = vunpack.c.l.b16 %v639
        %v768 = vunpack.c.l.b16 %v640
        %v769 = vunpack.c.l.b16 %v641
        %v770 = vunpack.c.l.b16 %v642
        %v771 = vunpack.c.l.b16 %v643
        %v772 = vunpack.c.l.b16 %v644
        %v773 = vunpack.c.l.b16 %v645
        %v774 = vunpack.c.l.b16 %v646
        %v775 = vunpack.c.l.b16 %v647
        %v776 = vunpack.c.l.b16 %v648
        %v777 = vunpack.c.l.b16 %v649
        %v778 = vunpack.c.l.b16 %v650
        %v779 = vunpack.c.l.b16 %v651
        %v780 = vunpack.c.l.b16 %v652
        %v781 = vunpack.c.l.b16 %v653
        %v782 = vunpack.c.l.b16 %v654
        %v783 = vunpack.c.l.b16 %v655
        %v784 = vunpack.c.l.b16 %v656
        %v785 = vunpack.c.l.b16 %v657
        %v786 = vunpack.c.l.b16 %v658
        %v787 = vunpack.c.l.b16 %v659
        %v788 = vunpack.c.l.b16 %v660
        %v789 = vunpack.c.l.b16 %v661
        %v790 = vunpack.c.l.b16 %v662
        %v791 = vunpack.c.l.b16 %v663
        %v792 = vunpack.c.l.b16 %v664
        %v793 = vunpack.c.l.b16 %v665
        %v794 = vunpack.c.l.b16 %v666
        %v795 = vunpack.c.l.b16 %v667
        %v796 = vunpack.c.l.b16 %v668
        %v797 = vunpack.c.l.b16 %v669
        %v798 = vunpack.c.l.b16 %v670
        %v799 = vunpack.c.l.b16 %v671
        %v800 = vunpack.c.l.b16 %v672
        %v801 = vunpack.c.l.b16 %v673
        %v802 = vunpack.c.l.b16 %v674
        %v803 = vunpack.c.l.b16 %v675
        %v804 = vunpack.c.l.b16 %v676
        %v805 = vunpack.c.l.b16 %v677
        %v806 = vpack.c.b16 %v743, %v742
        %v807 = vpack.c.b16 %v745, %v744
        %v808 = vpack.c.b16 %v747, %v746
        %v809 = vpack.c.b16 %v749, %v748
        %v810 = vpack.c.b16 %v751, %v750
        %v811 = vpack.c.b16 %v753, %v752
        %v812 = vpack.c.b16 %v755, %v754
        %v813 = vpack.c.b16 %v757, %v756
        %v814 = vpack.c.b16 %v759, %v758
        %v815 = vpack.c.b16 %v761, %v760
        %v816 = vpack.c.b16 %v763, %v762
        %v817 = vpack.c.b16 %v765, %v764
        %v818 = vpack.c.b16 %v767, %v766
        %v819 = vpack.c.b16 %v769, %v768
        %v820 = vpack.c.b16 %v771, %v770
        %v821 = vpack.c.b16 %v773, %v772
        %v822 = vpack.c.b16 %v775, %v774
        %v823 = vpack.c.b16 %v777, %v776
        %v824 = vpack.c.b16 %v779, %v778
        %v825 = vpack.c.b16 %v781, %v780
        %v826 = vpack.c.b16 %v783, %v782
        %v827 = vpack.c.b16 %v785, %v784
        %v828 = vpack.c.b16 %v787, %v786
        %v829 = vpack.c.b16 %v789, %v788
        %v830 = vpack.c.b16 %v791, %v790
        %v831 = vpack.c.b16 %v793, %v792
        %v832 = vpack.c.b16 %v795, %v794
        %v833 = vpack.c.b16 %v797, %v796
        %v834 = vpack.c.b16 %v799, %v798
        %v835 = vpack.c.b16 %v801, %v800
        %v836 = vpack.c.b16 %v803, %v802
        %v837 = vpack.c.b16 %v805, %v804
        %870 = vmatprep.subr.bf16.mxu0 0
        %871 = vmatpush1.bf16.msra.mxu0 %v813
        %872 = vmatprep.subr.bf16.mxu0 0
        %873 = vmatpush1.bf16.msra.mxu0 %v812
        %874 = vmatprep.subr.bf16.mxu0 0
        %875 = vmatpush1.bf16.msra.mxu0 %v811
        %876 = vmatprep.subr.bf16.mxu0 0
        %877 = vmatpush1.bf16.msra.mxu0 %v810
        %878 = vmatprep.subr.bf16.mxu0 0
        %879 = vmatpush1.bf16.msra.mxu0 %v809
        %880 = vmatprep.subr.bf16.mxu0 0
        %881 = vmatpush1.bf16.msra.mxu0 %v808
        %882 = vmatprep.subr.bf16.mxu0 0
        %883 = vmatpush1.bf16.msra.mxu0 %v807
        %884 = vmatprep.subr.bf16.mxu0 0
        %885 = vmatpush1.bf16.msra.mxu0 %v806
        %886 = vmatprep.subr.bf16.mxu0 0
        %887 = vmatpush2.bf16.msra.mxu0 %v821
        %888 = vmatprep.subr.bf16.mxu0 0
        %889 = vmatpush2.bf16.msra.mxu0 %v820
        %890 = vmatprep.subr.bf16.mxu0 0
        %891 = vmatpush2.bf16.msra.mxu0 %v819
        %892 = vmatprep.subr.bf16.mxu0 0
        %893 = vmatpush2.bf16.msra.mxu0 %v818
        %894 = vmatprep.subr.bf16.mxu0 0
        %895 = vmatpush2.bf16.msra.mxu0 %v817
        %896 = vmatprep.subr.bf16.mxu0 0
        %897 = vmatpush2.bf16.msra.mxu0 %v816
        %898 = vmatprep.subr.bf16.mxu0 0
        %899 = vmatpush2.bf16.msra.mxu0 %v815
        %900 = vmatprep.subr.bf16.mxu0 0
        %901 = vmatpush2.bf16.msra.mxu0 %v814
        %902 = vmatprep.mubr.bf16.mxu0 %v599
        %903 = vmatmul.mubr.bf16.gmra.mxu0 %v598
        %v904 = vpop.f32.mrf.mxu0
        %v905 = vadd.f32 0.0, %v904
        %v906 = vpop.f32.mrf.mxu0
        %v907 = vpop.f32.mrf.mxu0
        %v908 = vadd.f32 0.0, %v907
        %v909 = vpop.f32.mrf.mxu0
        %910 = vmatprep.mubr.bf16.mxu0 %v603
        %911 = vmatmul.mubr.bf16.gmra.mxu0 %v602
        %v912 = vpop.f32.mrf.mxu0
        %v913 = vadd.f32 0.0, %v912
        %v914 = vpop.f32.mrf.mxu0
        %v915 = vpop.f32.mrf.mxu0
        %v916 = vadd.f32 0.0, %v915
        %v917 = vpop.f32.mrf.mxu0
        %918 = vmatprep.mubr.bf16.mxu0 %v607
        %919 = vmatmul.mubr.bf16.gmra.mxu0 %v606
        %v920 = vpop.f32.mrf.mxu0
        %v921 = vadd.f32 0.0, %v920
        %v922 = vpop.f32.mrf.mxu0
        %v923 = vpop.f32.mrf.mxu0
        %v924 = vadd.f32 0.0, %v923
        %v925 = vpop.f32.mrf.mxu0
        %926 = vmatprep.mubr.bf16.mxu0 %v611
        %927 = vmatmul.mubr.bf16.gmra.mxu0 %v610
        %v928 = vpop.f32.mrf.mxu0
        %v929 = vadd.f32 0.0, %v928
        %v930 = vpop.f32.mrf.mxu0
        %v931 = vpop.f32.mrf.mxu0
        %v932 = vadd.f32 0.0, %v931
        %v933 = vpop.f32.mrf.mxu0
        %934 = vdwg.mxu0
        %935 = vmatprep.subr.bf16.mxu0 0
        %936 = vmatpush1.bf16.msra.mxu0 %v829
        %937 = vmatprep.subr.bf16.mxu0 0
        %938 = vmatpush1.bf16.msra.mxu0 %v828
        %939 = vmatprep.subr.bf16.mxu0 0
        %940 = vmatpush1.bf16.msra.mxu0 %v827
        %941 = vmatprep.subr.bf16.mxu0 0
        %942 = vmatpush1.bf16.msra.mxu0 %v826
        %943 = vmatprep.subr.bf16.mxu0 0
        %944 = vmatpush1.bf16.msra.mxu0 %v825
        %945 = vmatprep.subr.bf16.mxu0 0
        %946 = vmatpush1.bf16.msra.mxu0 %v824
        %947 = vmatprep.subr.bf16.mxu0 0
        %948 = vmatpush1.bf16.msra.mxu0 %v823
        %949 = vmatprep.subr.bf16.mxu0 0
        %950 = vmatpush1.bf16.msra.mxu0 %v822
        %951 = vmatprep.subr.bf16.mxu0 0
        %952 = vmatpush2.bf16.msra.mxu0 %v837
        %953 = vmatprep.subr.bf16.mxu0 0
        %954 = vmatpush2.bf16.msra.mxu0 %v836
        %955 = vmatprep.subr.bf16.mxu0 0
        %956 = vmatpush2.bf16.msra.mxu0 %v835
        %957 = vmatprep.subr.bf16.mxu0 0
        %958 = vmatpush2.bf16.msra.mxu0 %v834
        %959 = vmatprep.subr.bf16.mxu0 0
        %960 = vmatpush2.bf16.msra.mxu0 %v833
        %961 = vmatprep.subr.bf16.mxu0 0
        %962 = vmatpush2.bf16.msra.mxu0 %v832
        %963 = vmatprep.subr.bf16.mxu0 0
        %964 = vmatpush2.bf16.msra.mxu0 %v831
        %965 = vmatprep.subr.bf16.mxu0 0
        %966 = vmatpush2.bf16.msra.mxu0 %v830
        %967 = vmatprep.mubr.bf16.mxu0 %v601
        %968 = vmatmul.mubr.bf16.gmra.mxu0 %v600
        %v969 = vpop.f32.mrf.mxu0
        %v970 = vadd.f32 %v905, %v969
        %v971 = vpop.f32.mrf.mxu0
        %v972 = vpop.f32.mrf.mxu0
        %v973 = vadd.f32 %v908, %v972
        %v974 = vpop.f32.mrf.mxu0
        %975 = vmatprep.mubr.bf16.mxu0 %v605
        %976 = vmatmul.mubr.bf16.gmra.mxu0 %v604
        %v977 = vpop.f32.mrf.mxu0
        %v978 = vadd.f32 %v913, %v977
        %v979 = vpop.f32.mrf.mxu0
        %v980 = vpop.f32.mrf.mxu0
        %v981 = vadd.f32 %v916, %v980
        %v982 = vpop.f32.mrf.mxu0
        %983 = vmatprep.mubr.bf16.mxu0 %v609
        %984 = vmatmul.mubr.bf16.gmra.mxu0 %v608
        %v985 = vpop.f32.mrf.mxu0
        %v986 = vadd.f32 %v921, %v985
        %v987 = vpop.f32.mrf.mxu0
        %v988 = vpop.f32.mrf.mxu0
        %v989 = vadd.f32 %v924, %v988
        %v990 = vpop.f32.mrf.mxu0
        %991 = vmatprep.mubr.bf16.mxu0 %v613
        %992 = vmatmul.mubr.bf16.gmra.mxu0 %v612
        %v993 = vpop.f32.mrf.mxu0
        %v994 = vadd.f32 %v929, %v993
        %v995 = vpop.f32.mrf.mxu0
        %v996 = vpop.f32.mrf.mxu0
        %v997 = vadd.f32 %v932, %v996
        %v998 = vpop.f32.mrf.mxu0
        %999 = vdwg.mxu0
        %vm1000 = vcmask 261120
        %1001 = vst.msk [vmem:[#allocation2] sm:$0xff] %vm1000, %v970
        %1002 = vst.msk [vmem:[#allocation2 + $0x8] sm:$0xff] %vm1000, %v973
        %1003 = vst.msk [vmem:[#allocation2 + $0x10] sm:$0xff] %vm1000, %v978
        %1004 = vst.msk [vmem:[#allocation2 + $0x18] sm:$0xff] %vm1000, %v981
        %1005 = vst.msk [vmem:[#allocation2 + $0x20] sm:$0xff] %vm1000, %v986
        %1006 = vst.msk [vmem:[#allocation2 + $0x28] sm:$0xff] %vm1000, %v989
        %1007 = vst.msk [vmem:[#allocation2 + $0x30] sm:$0xff] %vm1000, %v994
        %1008 = vst.msk [vmem:[#allocation2 + $0x38] sm:$0xff] %vm1000, %v997
      $region40: #{tpu_custom_call.1} parent=35 // pred_fallthru
        _
      %v1009 = vld [vmem:[%s225] sm:$0xff]
      %v1010 = vld [vmem:[%s225 + $0x8] sm:$0xff]
      %v1011 = vld [vmem:[%s225 + $0x10] sm:$0xff]
      %v1012 = vld [vmem:[%s225 + $0x18] sm:$0xff]
      %v1013 = vld [vmem:[%s225 + $0x20] sm:$0xff]
      %v1014 = vld [vmem:[%s225 + $0x28] sm:$0xff]
      %v1015 = vld [vmem:[%s225 + $0x30] sm:$0xff]
      %v1016 = vld [vmem:[%s225 + $0x38] sm:$0xff]
      %v1017 = vld [vmem:[#allocation2] sm:$0xff]
      %v1018 = vld [vmem:[#allocation2 + $0x8] sm:$0xff]
      %v1019 = vld [vmem:[#allocation2 + $0x10] sm:$0xff]
      %v1020 = vld [vmem:[#allocation2 + $0x18] sm:$0xff]
      %v1021 = vld [vmem:[#allocation2 + $0x20] sm:$0xff]
      %v1022 = vld [vmem:[#allocation2 + $0x28] sm:$0xff]
      %v1023 = vld [vmem:[#allocation2 + $0x30] sm:$0xff]
      %v1024 = vld [vmem:[#allocation2 + $0x38] sm:$0xff]
      %v1025 = vadd.f32 %v1009, %v1017
      %v1026 = vadd.f32 %v1010, %v1018
      %v1027 = vadd.f32 %v1011, %v1019
      %v1028 = vadd.f32 %v1012, %v1020
      %v1029 = vadd.f32 %v1013, %v1021
      %v1030 = vadd.f32 %v1014, %v1022
      %v1031 = vadd.f32 %v1015, %v1023
      %v1032 = vadd.f32 %v1016, %v1024
      %vm1033 = vcmask 261120
      %1034 = vst.msk [vmem:[%s235] sm:$0xff] %vm1033, %v1025
      %1035 = vst.msk [vmem:[%s235 + $0x8] sm:$0xff] %vm1033, %v1026
      %1036 = vst.msk [vmem:[%s235 + $0x10] sm:$0xff] %vm1033, %v1027
      %1037 = vst.msk [vmem:[%s235 + $0x18] sm:$0xff] %vm1033, %v1028
      %1038 = vst.msk [vmem:[%s235 + $0x20] sm:$0xff] %vm1033, %v1029
      %1039 = vst.msk [vmem:[%s235 + $0x28] sm:$0xff] %vm1033, %v1030
      %1040 = vst.msk [vmem:[%s235 + $0x30] sm:$0xff] %vm1033, %v1031
      %1041 = vst.msk [vmem:[%s235 + $0x38] sm:$0xff] %vm1033, %v1032
      %s1042 = smul.u32 8, %s19
      %p1043 = scmp.lt.s32.totalorder %s20, 1
      %s1044 = scalar_select %p1043, %s20, 1
      %p1045 = scmp.lt.s32.totalorder %s1042, 7
      %s1046 = scalar_select %p1045, %s1042, 7
      %s1047 = smul.addr %s1044, 8
      %s1048 = sadd.s32 %s1046, %s1047
      %s1049 = smul.addr %s1048, 8
      %s1050 = scalar_lea.vmem %s4, %s1049
      // Predicated region
      $region41: #{tpu_custom_call.1} parent=35 // pred_check
        %p1051 = pneg %p138
      $region42: #{tpu_custom_call.1} parent=35 // pred_check_branch
        %1053 = sbr.rel (%p1051) target = $region44
      $region43: #{tpu_custom_call.1} parent=35 // pred_region
        %s1054 = smul.u32 8, %s19
      $region44: #{tpu_custom_call.1} parent=35 // pred_fallthru
        _
    $region36: #{tpu_custom_call.1} parent=5 // pred_fallthru
      _
    %p1055 = scmp.le.s32.totalorder 2, %s10
    // Predicated region
    $region45: #{tpu_custom_call.1} parent=5 // pred_check
      %p1056 = pneg %p1055
    $region46: #{tpu_custom_call.1} parent=5 // pred_check_branch
      %1058 = sbr.rel (%p1056) target = $region48
    $region47: #{tpu_custom_call.1} parent=5 // pred_region
      %s1059 = ssub.s32 %s10, 2
      // Predicated region
      $region49: #{tpu_custom_call.1} parent=47 // pred_check
        %p1060 = pneg %p144
      $region50: #{tpu_custom_call.1} parent=47 // pred_check_branch
        %1062 = sbr.rel (%p1060) target = $region52
      $region51: #{tpu_custom_call.1} parent=47 // pred_region
        %s1063 = smul.u32 8, %s21
        %p1064 = scmp.lt.s32.totalorder %s22, 1
        %s1065 = scalar_select %p1064, %s22, 1
        %p1066 = scmp.lt.s32.totalorder %s1063, 7
        %s1067 = scalar_select %p1066, %s1063, 7
        %s1068 = smul.addr %s1065, 8
        %s1069 = sadd.s32 %s1067, %s1068
        %s1070 = smul.addr %s1069, 8
        %s1071 = scalar_lea.vmem %s4, %s1070
      $region52: #{tpu_custom_call.1} parent=47 // pred_fallthru
        _
    $region48: #{tpu_custom_call.1} parent=5 // pred_fallthru
      _
  $region6: #{tpu_custom_call.1} parent=0 // loop_footer
    %s14 = sadd.s32 1, %s10
  $region7: #{tpu_custom_call.1} parent=0 // loop_footer_branch
    %9 = sbr.rel target = $region3
  $region8: #{tpu_custom_call.1} parent=0 // loop_exit
    _

</llo_original>
